<compile_context>
chip_gen: v7x
topology: tpu7x:2x2x1
jax: 0.10.0
libtpu: 0.0.40
codegen_flags: <defaults>
</compile_context>

<pallas_src>
import functools

import jax
import jax.numpy as jnp
from jax.experimental import pallas as pl
from jax.experimental.pallas import tpu as pltpu


def fm_kernel(x_ref, o_ref, *, fold_groups):
    """x_ref: (F, ROWS, 128) input block; o_ref: (8, 128) resident f32 accumulator."""
    step = pl.program_id(1)

    @pl.when(step == 0)
    def _():
        o_ref[...] = jnp.zeros_like(o_ref)

    x = x_ref[...].astype(jnp.float32)          # (F, ROWS, 128)
    s = jnp.sum(x, axis=0)                      # (ROWS, 128)  sum over field (VPU adds)
    q = jnp.sum(x * x, axis=0)                  # (ROWS, 128)  sum of squares over field
    contrib = s * s - q                         # (ROWS, 128)

    # Fold the sublane-row groups into the (8, 128) accumulator with pure VPU adds
    # (layout-preserving reshape: splits the major axis at (8,128)-tile boundaries).
    if fold_groups > 1:
        contrib = jnp.sum(contrib.reshape(fold_groups, 8, 128), axis=0)
    o_ref[...] += contrib


def fm_forward(x, *, target_block_bytes=2 * 1024 * 1024, n_splits=2):
    """x: (batch, field, embed) -> scalar f32 = 0.5 * sum((sum_f x)^2 - sum_f x^2)."""
    B, F, E = x.shape
    L = B * E
    itemsize = jnp.dtype(x.dtype).itemsize

    # Lane-dense layout: field -> leading (major) axis, (batch*embed) -> lane axis.
    xt = jnp.transpose(x, (1, 0, 2)).reshape(F, L)

    # Sublane granularity for the storage dtype (f32: 8, bf16: 16, int8/fp8: 32).
    sub = 8 * max(1, 4 // itemsize)
    rows_total = pl.cdiv(L, 128)
    rows_target = max(sub, (target_block_bytes // (F * 128 * itemsize)) // sub * sub)
    rows_needed = max(sub, pl.cdiv(rows_total, sub) * sub)
    rows_per_block = min(rows_target, rows_needed)

    steps = pl.cdiv(rows_total, rows_per_block * n_splits)
    rows_padded = steps * rows_per_block * n_splits
    l_pad = rows_padded * 128

    # Zero padding is correctness-neutral: padded lanes contribute s=0, q=0.
    xt = jnp.pad(xt, ((0, 0), (0, l_pad - L)))
    x3 = xt.reshape(F, rows_padded, 128)

    partials = pl.pallas_call(
        functools.partial(fm_kernel, fold_groups=rows_per_block // 8),
        out_shape=jax.ShapeDtypeStruct((n_splits * 8, 128), jnp.float32),
        grid_spec=pltpu.PrefetchScalarGridSpec(
            num_scalar_prefetch=0,
            grid=(n_splits, steps),
            in_specs=[pl.BlockSpec((F, rows_per_block, 128),
                                   lambda c, i: (0, c * steps + i, 0))],
            # Per-split resident accumulator block; lane-dense (8,128) stores.
            out_specs=pl.BlockSpec((8, 128), lambda c, i: (c, 0)),
        ),
        compiler_params=pltpu.CompilerParams(
            dimension_semantics=("parallel", "arbitrary"),
            vmem_limit_bytes=32 * 1024 * 1024,
        ),
    )(x3)

    # Tiny final reduction (n_splits*8*128 values) done in plain JAX.
    return 0.5 * jnp.sum(partials)


def fm_reference(x):
    x = x.astype(jnp.float32)
    inter1 = jnp.sum(x, axis=1) ** 2
    inter2 = jnp.sum(x ** 2, axis=1)
    return 0.5 * jnp.sum(inter1 - inter2)


if __name__ == "__main__":
    key = jax.random.PRNGKey(0)

    # Toy shape matching the module contract: batch=2, field=4, embed=16 (f32).
    x = jax.random.normal(key, (2, 4, 16), dtype=jnp.float32)
    out = jax.block_until_ready(fm_forward(x))
    ref = fm_reference(x)
    assert jnp.allclose(out, ref, rtol=1e-5, atol=1e-5), (out, ref)

    # Same shape with bf16 storage (exercises the in-kernel f32 cast + 16-row sublane tiling).
    xb = x.astype(jnp.bfloat16)
    outb = jax.block_until_ready(fm_forward(xb))
    refb = fm_reference(xb)
    assert jnp.allclose(outb, refb, rtol=1e-2, atol=1e-2), (outb, refb)

    # Larger shape with a small block budget to exercise multi-step accumulation,
    # both parallel splits, and the sublane fold (rows_per_block > 8).
    x2 = jax.random.normal(jax.random.PRNGKey(0), (512, 12, 16), dtype=jnp.float32)
    out2 = jax.block_until_ready(fm_forward(x2, target_block_bytes=112 * 1024))
    ref2 = fm_reference(x2)
    assert jnp.allclose(out2, ref2, rtol=1e-3, atol=0.5), (out2, ref2)

    print("KERNEL_OK")
</pallas_src>

<mosaic_0001>
module attributes {stable_mosaic.version = 11 : i64} {
  func.func @fm_kernel(%arg0: i32, %arg1: i32, %arg2: memref<4x8x128xf32, #tpu.memory_space<vmem>>, %arg3: memref<8x128xf32, #tpu.memory_space<vmem>>) attributes {dimension_semantics = [#tpu.dimension_semantics<parallel>, #tpu.dimension_semantics<arbitrary>], iteration_bounds = array<i64: 2, 1>, scalar_prefetch = 0 : i64, scratch_operands = 0 : i64, tpu.core_type = #tpu.core_type<tc>, window_params = [{transform_indices = @transform_0, window_bounds = array<i64: 4, 8, 128>}, {transform_indices = @transform_1, window_bounds = array<i64: 8, 128>}]} {
    %c0_i32 = arith.constant 0 : i32
    %0 = arith.cmpi eq, %arg1, %c0_i32 : i32
    %1 = arith.extui %0 : i1 to i32
    %c0_i32_0 = arith.constant 0 : i32
    %2 = arith.cmpi ne, %1, %c0_i32_0 : i32
    scf.if %2 {
      %cst_8 = arith.constant 0.000000e+00 : f32
      %12 = vector.broadcast %cst_8 : f32 to vector<8x128xf32>
      %c0_9 = arith.constant 0 : index
      %c0_10 = arith.constant 0 : index
      %13 = vector.load %arg3[%c0_9, %c0_10] : memref<8x128xf32, #tpu.memory_space<vmem>>, vector<8x128xf32>
      tpu.vector_store %arg3[%c0_9, %c0_10], %12 {strides = array<i32>} : memref<8x128xf32, #tpu.memory_space<vmem>>, vector<8x128xf32>,
    } else {
    }
    %c0 = arith.constant 0 : index
    %c0_1 = arith.constant 0 : index
    %c0_2 = arith.constant 0 : index
    %3 = vector.load %arg2[%c0, %c0_1, %c0_2] : memref<4x8x128xf32, #tpu.memory_space<vmem>>, vector<4x8x128xf32>
    %cst = arith.constant dense<0.000000e+00> : vector<8x128xf32>
    %4 = vector.multi_reduction <add>, %3, %cst [0] : vector<4x8x128xf32> to vector<8x128xf32>
    %5 = arith.mulf %3, %3 : vector<4x8x128xf32>
    %cst_3 = arith.constant dense<0.000000e+00> : vector<8x128xf32>
    %6 = vector.multi_reduction <add>, %5, %cst_3 [0] : vector<4x8x128xf32> to vector<8x128xf32>
    %7 = arith.mulf %4, %4 : vector<8x128xf32>
    %8 = arith.subf %7, %6 : vector<8x128xf32>
    %c0_4 = arith.constant 0 : index
    %c0_5 = arith.constant 0 : index
    %9 = vector.load %arg3[%c0_4, %c0_5] : memref<8x128xf32, #tpu.memory_space<vmem>>, vector<8x128xf32>
    %10 = arith.addf %9, %8 : vector<8x128xf32>
    %c0_6 = arith.constant 0 : index
    %c0_7 = arith.constant 0 : index
    %11 = vector.load %arg3[%c0_6, %c0_7] : memref<8x128xf32, #tpu.memory_space<vmem>>, vector<8x128xf32>
    tpu.vector_store %arg3[%c0_6, %c0_7], %10 {strides = array<i32>} : memref<8x128xf32, #tpu.memory_space<vmem>>, vector<8x128xf32>,
    return
  }
  func.func @transform_0(%arg0: i32, %arg1: i32) -> (i32, i32, i32) {
    %c1_i32 = arith.constant 1 : i32
    %0 = arith.muli %arg0, %c1_i32 : i32
    %1 = arith.addi %0, %arg1 : i32
    %c0_i32 = arith.constant 0 : i32
    %c0_i32_0 = arith.constant 0 : i32
    %c0_i32_1 = arith.constant 0 : i32
    return %c0_i32, %1, %c0_i32_0 : i32, i32, i32
  }
  func.func @transform_1(%arg0: i32, %arg1: i32) -> (i32, i32) {
    %c0_i32 = arith.constant 0 : i32
    %c0_i32_0 = arith.constant 0 : i32
    return %arg0, %c0_i32 : i32, i32
  }
}

</mosaic_0001>

<llo_original>
// kernel: tpu_custom_call.1
$region0: #{tpu_custom_call.1}
  #allocation0 [shape = 'u32[]', space=smem, size = 0x4, offset = 0x4, fixed_abs, tag = 'smem constant byte address 0x4 - core index']
  #allocation1 [shape = 'u32[144,128]{1,0:T(1,128)}', space=vmem, size = 0x12000, scoped, tag = 'internal scratch']
  %s0 = inlined_call_operand.hbm [shape: f32[4,16,128], index: 0, kind: input, shape index: {}]
  %s1 = inlined_call_operand.hbm [shape: f32[16,128], index: 1, kind: output, shape index: {}]
  %s2 = sld [smem:[#allocation0]]
  $region45: #{tpu_custom_call.1} parent=0
    _
  %s4 = ssub.s32 1, %s2
  %s5 = scalar_select 0, %s4, %s2
  $region1: #{tpu_custom_call.1} parent=0
    #allocation2 [shape = 'u8[32768]{0}', space=vmem, size = 0x8000, scoped, tag = 'input window, operand 0']
    #allocation3 [shape = 's32[2]{0}', space=sflag, size = 0x8, scoped, tag = 'scoped memory for tpu_custom_call.1']
    #allocation4 [shape = 's32[2]{0}', space=sflag, size = 0x8, scoped, tag = 'scoped memory for tpu_custom_call.1']
    #allocation5 [shape = 'u8[8192]{0}', space=vmem, size = 0x2000, scoped, tag = 'output window, operand 0']
    %6 = vsyncpa [#allocation3], 0
    %s7 = scalar_lea.sflag [#allocation3], 1
    %8 = vsyncpa %s7, 0
    %9 = vsyncpa [#allocation4], 0
    %s10 = scalar_lea.sflag [#allocation4], 1
    %11 = vsyncpa %s10, 0
    loop: start=0, step=1, limit=4
    $region2: #{tpu_custom_call.1} parent=1 // loop_pre_header
      _
    $region3: #{tpu_custom_call.1} parent=1 // loop_header
      %s13 = sphi 0, %s17
      %p14 = scmp.ge.s32.totalorder %s13, 4
      %s20 = sphi 0, %s32
      %s21 = sphi 0, %s28
      %s22 = sphi 0, %s20
      %s23 = sphi 0, %s21
      %s24 = sphi 0, %s22
      %s25 = sphi 0, %s23
      %s37 = sphi 0, %s39
      %s40 = sphi 0, %s37
      %s41 = sphi 0, %s40
      %s57 = sphi 0, %s41
      %s63 = sphi 0, %s65
      %s66 = sphi 0, %s63
      %s67 = sphi 0, %s66
      %s83 = sphi 0, %s67
    $region4: #{tpu_custom_call.1} parent=1 // loop_header_branch
      %16 = sbr.rel (%p14) target = $region8
    $region5: #{tpu_custom_call.1} parent=1 // loop_body
      %s18 = ssub.s32 %s13, 1
      %s19 = ssub.s32 %s13, 2
      %s26 = sadd.s32 1, %s21
      %p27 = scmp.ge.s32.totalorder %s26, 1
      %s28 = scalar_select %p27, 0, %s26
      %s29 = sadd.s32 1, %s20
      %s30 = scalar_select %p27, %s29, %s20
      %p31 = scmp.ge.s32.totalorder %s30, 2
      %s32 = scalar_select %p31, 0, %s30
      %s33 = sadd.s32 %s20, %s21
      %s34 = sadd.s32 %s32, %s28
      %s35 = ssub.s32 %s33, %s34
      %p36 = scmp.eq.s32.totalorder %s35, 0
      %s38 = sadd.s32 %s37, 1
      %s39 = scalar_select %p36, %s37, %s38
      %p42 = pneg %p36
      %p43 = scmp.eq.s32.totalorder %s13, 1
      %p44 = por %p42, %p43
      %p45 = scmp.ne.s32.totalorder %s37, %s40
      %p46 = scmp.eq.s32.totalorder %s13, 0
      %p47 = por %p45, %p46
      %p48 = scmp.ne.s32.totalorder %s37, %s40
      %p49 = scmp.eq.s32.totalorder %s18, 1
      %p50 = por %p48, %p49
      %p51 = scmp.ne.s32.totalorder %s40, %s41
      %p52 = scmp.eq.s32.totalorder %s18, 0
      %p53 = por %p51, %p52
      %p54 = scmp.ne.s32.totalorder %s40, %s41
      %p55 = scmp.eq.s32.totalorder %s19, 1
      %p56 = por %p54, %p55
      %p58 = scmp.ne.s32.totalorder %s41, %s57
      %p59 = scmp.eq.s32.totalorder %s19, 0
      %p60 = por %p58, %p59
      %s61 = ssub.s32 %s20, %s32
      %p62 = scmp.eq.s32.totalorder %s61, 0
      %s64 = sadd.s32 %s63, 1
      %s65 = scalar_select %p62, %s63, %s64
      %p68 = pneg %p62
      %p69 = scmp.eq.s32.totalorder %s13, 1
      %p70 = por %p68, %p69
      %p71 = scmp.ne.s32.totalorder %s63, %s66
      %p72 = scmp.eq.s32.totalorder %s13, 0
      %p73 = por %p71, %p72
      %p74 = scmp.ne.s32.totalorder %s63, %s66
      %p75 = scmp.eq.s32.totalorder %s18, 1
      %p76 = por %p74, %p75
      %p77 = scmp.ne.s32.totalorder %s66, %s67
      %p78 = scmp.eq.s32.totalorder %s18, 0
      %p79 = por %p77, %p78
      %p80 = scmp.ne.s32.totalorder %s66, %s67
      %p81 = scmp.eq.s32.totalorder %s19, 1
      %p82 = por %p80, %p81
      %p84 = scmp.ne.s32.totalorder %s67, %s83
      %p85 = scmp.eq.s32.totalorder %s19, 0
      %p86 = por %p84, %p85
      %p87 = scmp.le.s32.totalorder 1, %s13
      %p88 = scmp.lt.s32.totalorder %s13, 3
      %p89 = pnand %p87, %p88
      %p90 = pneg %p89
      // Predicated region
      $region9: #{tpu_custom_call.1} parent=5 // pred_check
        _
      $region10: #{tpu_custom_call.1} parent=5 // pred_check_branch
        %92 = sbr.rel (%p89) target = $region12
      $region11: #{tpu_custom_call.1} parent=5 // pred_region
        %s93 = ssub.s32 %s13, 1
      $region12: #{tpu_custom_call.1} parent=5 // pred_fallthru
        _
      %p94 = scmp.lt.s32.totalorder %s13, 2
      // Predicated region
      $region13: #{tpu_custom_call.1} parent=5 // pred_check
        %p95 = pneg %p94
      $region14: #{tpu_custom_call.1} parent=5 // pred_check_branch
        %97 = sbr.rel (%p95) target = $region16
      $region15: #{tpu_custom_call.1} parent=5 // pred_region
        // Predicated region
        $region17: #{tpu_custom_call.1} parent=15 // pred_check
          %p98 = pneg %p47
        $region18: #{tpu_custom_call.1} parent=15 // pred_check_branch
          %100 = sbr.rel (%p98) target = $region20
        $region19: #{tpu_custom_call.1} parent=15 // pred_region
          %s101 = sand.u32 %s37, 1
          %s102 = scalar_lea.sflag [#allocation3], %s101
          %s103 = sand.u32 %s37, 1
          %s104 = smul.addr %s103, 32
          %s105 = scalar_lea.vmem [#allocation2], %s104
          %s106 = sadd.s32 %s20, %s21
          %s108 = ssub.s32 512, 512
          %109 = vsyncadd %s102, %s108
          %s110 = smul.addr %s106, 128
          %s111 = scalar_lea.hbm %s0, %s110
          %s112 = sshll.u32 %s105, 4
          %s113 = int_to_ptr.vmem [resolvable:$true] %s112
          %118 = dma.hbm_to_vmem [thread:$0]  %s111, 512, %s113, %s102, 256, 128, 8
        $region20: #{tpu_custom_call.1} parent=15 // pred_fallthru
          _
      $region16: #{tpu_custom_call.1} parent=5 // pred_fallthru
        _
      %p119 = scmp.le.s32.totalorder 1, %s13
      %p120 = scmp.lt.s32.totalorder %s13, 3
      %p121 = pnand %p119, %p120
      %p122 = pneg %p121
      // Predicated region
      $region21: #{tpu_custom_call.1} parent=5 // pred_check
        _
      $region22: #{tpu_custom_call.1} parent=5 // pred_check_branch
        %124 = sbr.rel (%p121) target = $region24
      $region23: #{tpu_custom_call.1} parent=5 // pred_region
        %s125 = ssub.s32 %s13, 1
        %s126 = sand.u32 %s40, 1
        %s127 = scalar_lea.sflag [#allocation3], %s126
        %s128 = sand.u32 %s40, 1
        %s129 = smul.addr %s128, 32
        %s130 = scalar_lea.vmem [#allocation2], %s129
        // Predicated region
        $region25: #{tpu_custom_call.1} parent=23 // pred_check
          %p131 = pneg %p53
        $region26: #{tpu_custom_call.1} parent=23 // pred_check_branch
          %133 = sbr.rel (%p131) target = $region28
        $region27: #{tpu_custom_call.1} parent=23 // pred_region
          %134 = dma.done %s127, 512
        $region28: #{tpu_custom_call.1} parent=23 // pred_fallthru
          _
        %s135 = sand.u32 %s40, 1
        %s136 = scalar_lea.sflag [#allocation3], %s135
        %s137 = sand.u32 %s40, 1
        %s138 = smul.addr %s137, 32
        %s139 = scalar_lea.vmem [#allocation2], %s138
        %p140 = pneg %p53
        %p141 = pneg %p50
        %p142 = pneg %p79
        %p143 = pneg %p76
        %s144 = sand.u32 %s66, 1
        %s145 = scalar_lea.sflag [#allocation4], %s144
        %s146 = sand.u32 %s66, 1
        %s147 = smul.addr %s146, 8
        %s148 = scalar_lea.vmem [#allocation5], %s147
        %s149 = sadd.s32 %s22, %s23
        %p150 = scmp.eq.s32.totalorder %s23, 0
        // Predicated region
        $region29: #{tpu_custom_call.1} parent=23 // pred_check
          %p151 = pneg %p150
        $region30: #{tpu_custom_call.1} parent=23 // pred_check_branch
          %153 = sbr.rel (%p151) target = $region32
        $region31: #{tpu_custom_call.1} parent=23 // pred_region
          %154 = vst [vmem:[%s148] sm:$0xff] 0.0
        $region32: #{tpu_custom_call.1} parent=23 // pred_fallthru
          _
        %v155 = vld [vmem:[%s130] sm:$0xff]
        %v156 = vld [vmem:[%s130 + $0x8] sm:$0xff]
        %v157 = vld [vmem:[%s130 + $0x10] sm:$0xff]
        %v158 = vld [vmem:[%s130 + $0x18] sm:$0xff]
        %v159 = vadd.f32 %v155, %v156
        %v160 = vadd.f32 %v159, %v157
        %v161 = vadd.f32 %v160, %v158
        %v162 = vmul.f32 %v155, %v155
        %v163 = vmul.f32 %v156, %v156
        %v164 = vmul.f32 %v157, %v157
        %v165 = vmul.f32 %v158, %v158
        %v166 = vadd.f32 %v162, %v163
        %v167 = vadd.f32 %v166, %v164
        %v168 = vadd.f32 %v167, %v165
        %v169 = vmul.f32 %v161, %v161
        %v170 = vsub.f32 %v169, %v168
        %v171 = vld [vmem:[%s148] sm:$0xff]
        %v172 = vadd.f32 %v171, %v170
        %173 = vst [vmem:[%s148] sm:$0xff] %v172
        %s174 = sand.u32 %s66, 1
        %s175 = scalar_lea.sflag [#allocation4], %s174
        %s176 = sand.u32 %s66, 1
        %s177 = smul.addr %s176, 8
        %s178 = scalar_lea.vmem [#allocation5], %s177
        // Predicated region
        $region33: #{tpu_custom_call.1} parent=23 // pred_check
          %p179 = pneg %p76
        $region34: #{tpu_custom_call.1} parent=23 // pred_check_branch
          %181 = sbr.rel (%p179) target = $region36
        $region35: #{tpu_custom_call.1} parent=23 // pred_region
          %s183 = ssub.s32 128, 128
          %184 = vsyncadd %s175, %s183
          %s185 = smul.addr %s22, 128
          %s186 = scalar_lea.hbm %s1, %s185
          %s188 = sshll.u32 %s178, 4
          %s189 = int_to_ptr.vmem [resolvable:$true] %s188
          %191 = dma.vmem_to_hbm [thread:$0]  %s189, 128, %s186, %s175
        $region36: #{tpu_custom_call.1} parent=23 // pred_fallthru
          _
      $region24: #{tpu_custom_call.1} parent=5 // pred_fallthru
        _
      %p192 = scmp.le.s32.totalorder 2, %s13
      // Predicated region
      $region37: #{tpu_custom_call.1} parent=5 // pred_check
        %p193 = pneg %p192
      $region38: #{tpu_custom_call.1} parent=5 // pred_check_branch
        %195 = sbr.rel (%p193) target = $region40
      $region39: #{tpu_custom_call.1} parent=5 // pred_region
        %s196 = ssub.s32 %s13, 2
        // Predicated region
        $region41: #{tpu_custom_call.1} parent=39 // pred_check
          %p197 = pneg %p82
        $region42: #{tpu_custom_call.1} parent=39 // pred_check_branch
          %199 = sbr.rel (%p197) target = $region44
        $region43: #{tpu_custom_call.1} parent=39 // pred_region
          %s200 = sand.u32 %s67, 1
          %s201 = scalar_lea.sflag [#allocation4], %s200
          %s202 = sand.u32 %s67, 1
          %s203 = smul.addr %s202, 8
          %s204 = scalar_lea.vmem [#allocation5], %s203
          %205 = dma.done %s201, 128
        $region44: #{tpu_custom_call.1} parent=39 // pred_fallthru
          _
      $region40: #{tpu_custom_call.1} parent=5 // pred_fallthru
        _
    $region6: #{tpu_custom_call.1} parent=1 // loop_footer
      %s17 = sadd.s32 1, %s13
    $region7: #{tpu_custom_call.1} parent=1 // loop_footer_branch
      %12 = sbr.rel target = $region3
    $region8: #{tpu_custom_call.1} parent=1 // loop_exit
      _
    %206 = vsyncpa [#allocation3], 1
    %s207 = scalar_lea.sflag [#allocation3], 1
    %208 = vsyncpa %s207, 1
    %209 = vsyncpa [#allocation4], 1
    %s210 = scalar_lea.sflag [#allocation4], 1
    %211 = vsyncpa %s210, 1

</llo_original>
